<compile_context>
chip_gen: v7x
topology: tpu7x:2x2x1
jax: 0.10.0
libtpu: 0.0.40
codegen_flags: <defaults>
</compile_context>

<pallas_src>
from functools import partial

import numpy as np
import jax
import jax.numpy as jnp
from jax.experimental import pallas as pl
from jax.experimental.pallas import tpu as pltpu

TAU = 2.0
V_TH = 1.0

# Set to jnp.bfloat16 for ~2-3x MXU throughput on the spike-side matmuls (breaks the 1e-5
# parity test with the f32 reference by ~1e-3 relative error, so default is f32).
SPIKE_WEIGHT_DTYPE = jnp.float32


def _round_up(n, m):
    return ((n + m - 1) // m) * m


def fusenet_kernel(img_ref, audp_ref,
                   w1_ref, b1_ref, w2_ref, b2_ref, w3_ref,
                   o_ref,
                   *, num_steps, batch):
    T, B = num_steps, batch

    def lif_seq(x_all):
        # x_all: [T*B, N] -> stacked spikes [T*B, N], all kept in registers (no VMEM scratch).
        xs = x_all * 0.5                         # full-block, full-sublane; off the serial chain
        n = x_all.shape[1]
        v = jnp.zeros((B, n), jnp.float32)
        spikes = []
        for t in range(T):                       # serial part: one add + cmp + select per step
            v = 0.5 * v + xs[t * B:(t + 1) * B, :]
            fire = v >= V_TH
            spikes.append(fire.astype(jnp.float32))
            v = jnp.where(fire, 0.0, v)          # hard reset to v_reset = 0
        return jnp.concatenate(spikes, axis=0)

    # ---- img_fc1 hoisted out of the time recurrence: one [T*B, Din] x [Din, HID] matmul ----
    h1 = jnp.dot(img_ref[...], w1_ref[...],
                 preferred_element_type=jnp.float32) + b1_ref[...]
    s1 = lif_seq(h1)

    # ---- img_fc2: one [T*B, HID] x [HID, F_pad] matmul (spike cast to weight dtype is exact) ----
    h2 = jnp.dot(s1.astype(w2_ref.dtype), w2_ref[...],
                 preferred_element_type=jnp.float32) + b2_ref[...]
    s2 = lif_seq(h2)

    # ---- fuse_fc: image half of the concat-matmul; the audio half (+ b3) was precomputed
    #      outside the kernel (stateless), zero-padded to 128 lanes, and passed in as audp ----
    h3 = jnp.dot(s2.astype(w3_ref.dtype), w3_ref[...],
                 preferred_element_type=jnp.float32) + audp_ref[...]

    # ---- LIF3 + mean over T, accumulated straight into the (lane-dense) output block ----
    nout = h3.shape[1]
    xs3 = h3 * 0.5
    v = jnp.zeros((B, nout), jnp.float32)
    acc = jnp.zeros((B, nout), jnp.float32)
    for t in range(T):
        v = 0.5 * v + xs3[t * B:(t + 1) * B, :]
        fire = v >= V_TH
        acc = acc + fire.astype(jnp.float32)
        v = jnp.where(fire, 0.0, v)
    o_ref[...] = acc * (1.0 / T)                 # out.mean(0)


def fusenet_forward(img, audio, params):
    """img: [T,B,Din] f32, audio: [T,B,...] f32, params: dict of weights/biases."""
    T, B, Din = img.shape
    aud = audio.reshape(T, B, -1).astype(jnp.float32)   # layer.Flatten in step mode 'm'
    img_flat = img.reshape(T * B, Din).astype(jnp.float32)
    aud_flat = aud.reshape(T * B, -1)

    w1, b1 = params["w1"], params["b1"]
    w2, b2 = params["w2"], params["b2"]
    w3i, w3a, b3 = params["w3_img"], params["w3_aud"], params["b3"]
    HID, F, OUT = w1.shape[1], w2.shape[1], w3i.shape[1]
    F_PAD = _round_up(F, 128)
    OUT_PAD = _round_up(OUT, 128)

    # Stateless audio branch hoisted to plain XLA, bias folded in, padded to 128 lanes.
    aud_proj = aud_flat @ w3a + b3                                    # [T*B, OUT]
    aud_proj = jnp.pad(aud_proj, ((0, 0), (0, OUT_PAD - OUT)))        # [T*B, OUT_PAD]

    # Zero-pad the image branch so every in-kernel tensor is 128-lane dense.
    w2p = jnp.pad(w2, ((0, 0), (0, F_PAD - F))).astype(SPIKE_WEIGHT_DTYPE)
    b2p = jnp.pad(b2, ((0, 0), (0, F_PAD - F)))
    w3p = jnp.pad(w3i, ((0, F_PAD - F), (0, OUT_PAD - OUT))).astype(SPIKE_WEIGHT_DTYPE)

    vmem = pl.BlockSpec(memory_space=pltpu.MemorySpace.VMEM)
    out_pad = pl.pallas_call(
        partial(fusenet_kernel, num_steps=T, batch=B),
        out_shape=jax.ShapeDtypeStruct((B, OUT_PAD), jnp.float32),
        in_specs=[vmem] * 7,          # everything fits and stays resident in VMEM
        out_specs=vmem,
    )(img_flat, aud_proj, w1, b1, w2p, b2p, w3p)
    return out_pad[:, :OUT]


def fusenet_reference(img, audio, params):
    """Pure-JAX reference of the torch forward (for correctness check).

    LIF update written as 0.5*v + 0.5*x, algebraically identical to v + (x - v)/tau for
    tau = 2.0 (halving is exact in FP), matching the kernel's form so the comparison is not
    sensitive to ULP-level threshold ties."""
    T, B, _ = img.shape
    aud = audio.reshape(T, B, -1)

    def lif_seq(x_seq):  # x_seq: [T,B,D]
        v = jnp.zeros_like(x_seq[0])
        outs = []
        for t in range(x_seq.shape[0]):
            v = 0.5 * v + 0.5 * x_seq[t]
            fire = v >= V_TH
            outs.append(fire.astype(jnp.float32))
            v = jnp.where(fire, 0.0, v)
        return jnp.stack(outs)

    h = img @ params["w1"] + params["b1"]
    s1 = lif_seq(h)
    h = s1 @ params["w2"] + params["b2"]
    s2 = lif_seq(h)
    fuse = jnp.concatenate([s2, aud], axis=-1)
    w3 = jnp.concatenate([params["w3_img"], params["w3_aud"]], axis=0)
    h = fuse @ w3 + params["b3"]
    s3 = lif_seq(h)
    return s3.mean(0)


def init_params(key, din, hid, feat, aud, out):
    ks = jax.random.split(key, 6)

    def lin(k, fan_in, fan_out):
        bound = 1.0 / np.sqrt(fan_in)
        kw, kb = jax.random.split(k)
        w = jax.random.uniform(kw, (fan_in, fan_out), jnp.float32, -bound, bound)
        b = jax.random.uniform(kb, (1, fan_out), jnp.float32, -bound, bound)
        return w, b

    w1, b1 = lin(ks[0], din, hid)
    w2, b2 = lin(ks[1], hid, feat)
    w3, b3 = lin(ks[2], feat + aud, out)
    return {"w1": w1, "b1": b1, "w2": w2, "b2": b2,
            "w3_img": w3[:feat], "w3_aud": w3[feat:], "b3": b3}


if __name__ == "__main__":
    # Small, module-consistent shapes: T time steps, batch B, scaled-down img dims,
    # audio flattens to 80 features, fusion output is 3 classes.
    T, B = 8, 2
    DIN, HID, FEAT = 512, 256, 100      # (original: 25088, 4096, 100)
    AUD_C, AUD_L = 4, 20                # flattens to 80
    OUT = 3

    key = jax.random.PRNGKey(0)
    k_img, k_aud, k_par = jax.random.split(key, 3)
    img = jax.random.normal(k_img, (T, B, DIN), jnp.float32) * 0.5
    audio = jax.random.normal(k_aud, (T, B, AUD_C, AUD_L), jnp.float32)
    params = init_params(k_par, DIN, HID, FEAT, AUD_C * AUD_L, OUT)

    out = fusenet_forward(img, audio, params)
    out = jax.block_until_ready(out)

    ref = fusenet_reference(img, audio, params)
    np.testing.assert_allclose(np.asarray(out), np.asarray(ref), rtol=1e-5, atol=1e-5)

    print("KERNEL_OK")
</pallas_src>

<mosaic_0001>
module attributes {stable_mosaic.version = 11 : i64} {
  func.func @fusenet_kernel(%arg0: memref<16x512xf32, #tpu.memory_space<vmem>>, %arg1: memref<16x128xf32, #tpu.memory_space<vmem>>, %arg2: memref<512x256xf32, #tpu.memory_space<vmem>>, %arg3: memref<1x256xf32, #tpu.memory_space<vmem>>, %arg4: memref<256x128xf32, #tpu.memory_space<vmem>>, %arg5: memref<1x128xf32, #tpu.memory_space<vmem>>, %arg6: memref<128x128xf32, #tpu.memory_space<vmem>>, %arg7: memref<2x128xf32, #tpu.memory_space<vmem>>) attributes {dimension_semantics = [], scalar_prefetch = 0 : i64, scratch_operands = 0 : i64, tpu.core_type = #tpu.core_type<tc>} {
    %c0 = arith.constant 0 : index
    %c0_0 = arith.constant 0 : index
    %0 = vector.load %arg0[%c0, %c0_0] : memref<16x512xf32, #tpu.memory_space<vmem>>, vector<16x512xf32>
    %c0_1 = arith.constant 0 : index
    %c0_2 = arith.constant 0 : index
    %1 = vector.load %arg2[%c0_1, %c0_2] : memref<512x256xf32, #tpu.memory_space<vmem>>, vector<512x256xf32>
    %cst = arith.constant dense<0.000000e+00> : vector<16x256xf32>
    %2 = tpu.matmul %0, %1, %cst {dimension_numbers = #tpu.dot_dimension_numbers<[1], [0], [0], [1], [0, 0, 1, 1], [], []>} : vector<16x512xf32>, vector<512x256xf32>, vector<16x256xf32> -> vector<16x256xf32>
    %c0_3 = arith.constant 0 : index
    %c0_4 = arith.constant 0 : index
    %3 = vector.load %arg3[%c0_3, %c0_4] : memref<1x256xf32, #tpu.memory_space<vmem>>, vector<1x256xf32>
    %4 = vector.broadcast %3 : vector<1x256xf32> to vector<16x256xf32>
    %5 = arith.addf %2, %4 : vector<16x256xf32>
    %cst_5 = arith.constant 5.000000e-01 : f32
    %6 = vector.broadcast %cst_5 : f32 to vector<16x256xf32>
    %7 = arith.mulf %5, %6 : vector<16x256xf32>
    %cst_6 = arith.constant 0.000000e+00 : f32
    %8 = vector.broadcast %cst_6 : f32 to vector<2x256xf32>
    %cst_7 = arith.constant 5.000000e-01 : f32
    %9 = vector.broadcast %cst_7 : f32 to vector<2x256xf32>
    %10 = arith.mulf %9, %8 : vector<2x256xf32>
    %11 = vector.extract_strided_slice %7 {offsets = [0, 0], sizes = [2, 256], strides = [1, 1]} : vector<16x256xf32> to vector<2x256xf32>
    %12 = arith.addf %10, %11 : vector<2x256xf32>
    %cst_8 = arith.constant 1.000000e+00 : f32
    %13 = vector.broadcast %cst_8 : f32 to vector<2x256xf32>
    %14 = arith.cmpf oge, %12, %13 : vector<2x256xf32>
    %15 = arith.extui %14 : vector<2x256xi1> to vector<2x256xi32>
    %16 = arith.sitofp %15 : vector<2x256xi32> to vector<2x256xf32>
    %cst_9 = arith.constant 0.000000e+00 : f32
    %17 = vector.broadcast %cst_9 : f32 to vector<2x256xf32>
    %18 = arith.select %14, %17, %12 : vector<2x256xi1>, vector<2x256xf32>
    %cst_10 = arith.constant 5.000000e-01 : f32
    %19 = vector.broadcast %cst_10 : f32 to vector<2x256xf32>
    %20 = arith.mulf %19, %18 : vector<2x256xf32>
    %21 = vector.extract_strided_slice %7 {offsets = [2, 0], sizes = [2, 256], strides = [1, 1]} : vector<16x256xf32> to vector<2x256xf32>
    %22 = arith.addf %20, %21 : vector<2x256xf32>
    %cst_11 = arith.constant 1.000000e+00 : f32
    %23 = vector.broadcast %cst_11 : f32 to vector<2x256xf32>
    %24 = arith.cmpf oge, %22, %23 : vector<2x256xf32>
    %25 = arith.extui %24 : vector<2x256xi1> to vector<2x256xi32>
    %26 = arith.sitofp %25 : vector<2x256xi32> to vector<2x256xf32>
    %cst_12 = arith.constant 0.000000e+00 : f32
    %27 = vector.broadcast %cst_12 : f32 to vector<2x256xf32>
    %28 = arith.select %24, %27, %22 : vector<2x256xi1>, vector<2x256xf32>
    %cst_13 = arith.constant 5.000000e-01 : f32
    %29 = vector.broadcast %cst_13 : f32 to vector<2x256xf32>
    %30 = arith.mulf %29, %28 : vector<2x256xf32>
    %31 = vector.extract_strided_slice %7 {offsets = [4, 0], sizes = [2, 256], strides = [1, 1]} : vector<16x256xf32> to vector<2x256xf32>
    %32 = arith.addf %30, %31 : vector<2x256xf32>
    %cst_14 = arith.constant 1.000000e+00 : f32
    %33 = vector.broadcast %cst_14 : f32 to vector<2x256xf32>
    %34 = arith.cmpf oge, %32, %33 : vector<2x256xf32>
    %35 = arith.extui %34 : vector<2x256xi1> to vector<2x256xi32>
    %36 = arith.sitofp %35 : vector<2x256xi32> to vector<2x256xf32>
    %cst_15 = arith.constant 0.000000e+00 : f32
    %37 = vector.broadcast %cst_15 : f32 to vector<2x256xf32>
    %38 = arith.select %34, %37, %32 : vector<2x256xi1>, vector<2x256xf32>
    %cst_16 = arith.constant 5.000000e-01 : f32
    %39 = vector.broadcast %cst_16 : f32 to vector<2x256xf32>
    %40 = arith.mulf %39, %38 : vector<2x256xf32>
    %41 = vector.extract_strided_slice %7 {offsets = [6, 0], sizes = [2, 256], strides = [1, 1]} : vector<16x256xf32> to vector<2x256xf32>
    %42 = arith.addf %40, %41 : vector<2x256xf32>
    %cst_17 = arith.constant 1.000000e+00 : f32
    %43 = vector.broadcast %cst_17 : f32 to vector<2x256xf32>
    %44 = arith.cmpf oge, %42, %43 : vector<2x256xf32>
    %45 = arith.extui %44 : vector<2x256xi1> to vector<2x256xi32>
    %46 = arith.sitofp %45 : vector<2x256xi32> to vector<2x256xf32>
    %cst_18 = arith.constant 0.000000e+00 : f32
    %47 = vector.broadcast %cst_18 : f32 to vector<2x256xf32>
    %48 = arith.select %44, %47, %42 : vector<2x256xi1>, vector<2x256xf32>
    %cst_19 = arith.constant 5.000000e-01 : f32
    %49 = vector.broadcast %cst_19 : f32 to vector<2x256xf32>
    %50 = arith.mulf %49, %48 : vector<2x256xf32>
    %51 = vector.extract_strided_slice %7 {offsets = [8, 0], sizes = [2, 256], strides = [1, 1]} : vector<16x256xf32> to vector<2x256xf32>
    %52 = arith.addf %50, %51 : vector<2x256xf32>
    %cst_20 = arith.constant 1.000000e+00 : f32
    %53 = vector.broadcast %cst_20 : f32 to vector<2x256xf32>
    %54 = arith.cmpf oge, %52, %53 : vector<2x256xf32>
    %55 = arith.extui %54 : vector<2x256xi1> to vector<2x256xi32>
    %56 = arith.sitofp %55 : vector<2x256xi32> to vector<2x256xf32>
    %cst_21 = arith.constant 0.000000e+00 : f32
    %57 = vector.broadcast %cst_21 : f32 to vector<2x256xf32>
    %58 = arith.select %54, %57, %52 : vector<2x256xi1>, vector<2x256xf32>
    %cst_22 = arith.constant 5.000000e-01 : f32
    %59 = vector.broadcast %cst_22 : f32 to vector<2x256xf32>
    %60 = arith.mulf %59, %58 : vector<2x256xf32>
    %61 = vector.extract_strided_slice %7 {offsets = [10, 0], sizes = [2, 256], strides = [1, 1]} : vector<16x256xf32> to vector<2x256xf32>
    %62 = arith.addf %60, %61 : vector<2x256xf32>
    %cst_23 = arith.constant 1.000000e+00 : f32
    %63 = vector.broadcast %cst_23 : f32 to vector<2x256xf32>
    %64 = arith.cmpf oge, %62, %63 : vector<2x256xf32>
    %65 = arith.extui %64 : vector<2x256xi1> to vector<2x256xi32>
    %66 = arith.sitofp %65 : vector<2x256xi32> to vector<2x256xf32>
    %cst_24 = arith.constant 0.000000e+00 : f32
    %67 = vector.broadcast %cst_24 : f32 to vector<2x256xf32>
    %68 = arith.select %64, %67, %62 : vector<2x256xi1>, vector<2x256xf32>
    %cst_25 = arith.constant 5.000000e-01 : f32
    %69 = vector.broadcast %cst_25 : f32 to vector<2x256xf32>
    %70 = arith.mulf %69, %68 : vector<2x256xf32>
    %71 = vector.extract_strided_slice %7 {offsets = [12, 0], sizes = [2, 256], strides = [1, 1]} : vector<16x256xf32> to vector<2x256xf32>
    %72 = arith.addf %70, %71 : vector<2x256xf32>
    %cst_26 = arith.constant 1.000000e+00 : f32
    %73 = vector.broadcast %cst_26 : f32 to vector<2x256xf32>
    %74 = arith.cmpf oge, %72, %73 : vector<2x256xf32>
    %75 = arith.extui %74 : vector<2x256xi1> to vector<2x256xi32>
    %76 = arith.sitofp %75 : vector<2x256xi32> to vector<2x256xf32>
    %cst_27 = arith.constant 0.000000e+00 : f32
    %77 = vector.broadcast %cst_27 : f32 to vector<2x256xf32>
    %78 = arith.select %74, %77, %72 : vector<2x256xi1>, vector<2x256xf32>
    %cst_28 = arith.constant 5.000000e-01 : f32
    %79 = vector.broadcast %cst_28 : f32 to vector<2x256xf32>
    %80 = arith.mulf %79, %78 : vector<2x256xf32>
    %81 = vector.extract_strided_slice %7 {offsets = [14, 0], sizes = [2, 256], strides = [1, 1]} : vector<16x256xf32> to vector<2x256xf32>
    %82 = arith.addf %80, %81 : vector<2x256xf32>
    %cst_29 = arith.constant 1.000000e+00 : f32
    %83 = vector.broadcast %cst_29 : f32 to vector<2x256xf32>
    %84 = arith.cmpf oge, %82, %83 : vector<2x256xf32>
    %85 = arith.extui %84 : vector<2x256xi1> to vector<2x256xi32>
    %86 = arith.sitofp %85 : vector<2x256xi32> to vector<2x256xf32>
    %87 = tpu.concatenate %16, %26, %36, %46, %56, %66, %76, %86 in 0 : vector<2x256xf32>, vector<2x256xf32>, vector<2x256xf32>, vector<2x256xf32>, vector<2x256xf32>, vector<2x256xf32>, vector<2x256xf32>, vector<2x256xf32> -> vector<16x256xf32>
    %c0_30 = arith.constant 0 : index
    %c0_31 = arith.constant 0 : index
    %88 = vector.load %arg4[%c0_30, %c0_31] : memref<256x128xf32, #tpu.memory_space<vmem>>, vector<256x128xf32>
    %cst_32 = arith.constant dense<0.000000e+00> : vector<16x128xf32>
    %89 = tpu.matmul %87, %88, %cst_32 {dimension_numbers = #tpu.dot_dimension_numbers<[1], [0], [0], [1], [0, 0, 1, 1], [], []>} : vector<16x256xf32>, vector<256x128xf32>, vector<16x128xf32> -> vector<16x128xf32>
    %c0_33 = arith.constant 0 : index
    %c0_34 = arith.constant 0 : index
    %90 = vector.load %arg5[%c0_33, %c0_34] : memref<1x128xf32, #tpu.memory_space<vmem>>, vector<1x128xf32>
    %91 = vector.broadcast %90 : vector<1x128xf32> to vector<16x128xf32>
    %92 = arith.addf %89, %91 : vector<16x128xf32>
    %cst_35 = arith.constant 5.000000e-01 : f32
    %93 = vector.broadcast %cst_35 : f32 to vector<16x128xf32>
    %94 = arith.mulf %92, %93 : vector<16x128xf32>
    %cst_36 = arith.constant 0.000000e+00 : f32
    %95 = vector.broadcast %cst_36 : f32 to vector<2x128xf32>
    %cst_37 = arith.constant 5.000000e-01 : f32
    %96 = vector.broadcast %cst_37 : f32 to vector<2x128xf32>
    %97 = arith.mulf %96, %95 : vector<2x128xf32>
    %98 = vector.extract_strided_slice %94 {offsets = [0, 0], sizes = [2, 128], strides = [1, 1]} : vector<16x128xf32> to vector<2x128xf32>
    %99 = arith.addf %97, %98 : vector<2x128xf32>
    %cst_38 = arith.constant 1.000000e+00 : f32
    %100 = vector.broadcast %cst_38 : f32 to vector<2x128xf32>
    %101 = arith.cmpf oge, %99, %100 : vector<2x128xf32>
    %102 = arith.extui %101 : vector<2x128xi1> to vector<2x128xi32>
    %103 = arith.sitofp %102 : vector<2x128xi32> to vector<2x128xf32>
    %cst_39 = arith.constant 0.000000e+00 : f32
    %104 = vector.broadcast %cst_39 : f32 to vector<2x128xf32>
    %105 = arith.select %101, %104, %99 : vector<2x128xi1>, vector<2x128xf32>
    %cst_40 = arith.constant 5.000000e-01 : f32
    %106 = vector.broadcast %cst_40 : f32 to vector<2x128xf32>
    %107 = arith.mulf %106, %105 : vector<2x128xf32>
    %108 = vector.extract_strided_slice %94 {offsets = [2, 0], sizes = [2, 128], strides = [1, 1]} : vector<16x128xf32> to vector<2x128xf32>
    %109 = arith.addf %107, %108 : vector<2x128xf32>
    %cst_41 = arith.constant 1.000000e+00 : f32
    %110 = vector.broadcast %cst_41 : f32 to vector<2x128xf32>
    %111 = arith.cmpf oge, %109, %110 : vector<2x128xf32>
    %112 = arith.extui %111 : vector<2x128xi1> to vector<2x128xi32>
    %113 = arith.sitofp %112 : vector<2x128xi32> to vector<2x128xf32>
    %cst_42 = arith.constant 0.000000e+00 : f32
    %114 = vector.broadcast %cst_42 : f32 to vector<2x128xf32>
    %115 = arith.select %111, %114, %109 : vector<2x128xi1>, vector<2x128xf32>
    %cst_43 = arith.constant 5.000000e-01 : f32
    %116 = vector.broadcast %cst_43 : f32 to vector<2x128xf32>
    %117 = arith.mulf %116, %115 : vector<2x128xf32>
    %118 = vector.extract_strided_slice %94 {offsets = [4, 0], sizes = [2, 128], strides = [1, 1]} : vector<16x128xf32> to vector<2x128xf32>
    %119 = arith.addf %117, %118 : vector<2x128xf32>
    %cst_44 = arith.constant 1.000000e+00 : f32
    %120 = vector.broadcast %cst_44 : f32 to vector<2x128xf32>
    %121 = arith.cmpf oge, %119, %120 : vector<2x128xf32>
    %122 = arith.extui %121 : vector<2x128xi1> to vector<2x128xi32>
    %123 = arith.sitofp %122 : vector<2x128xi32> to vector<2x128xf32>
    %cst_45 = arith.constant 0.000000e+00 : f32
    %124 = vector.broadcast %cst_45 : f32 to vector<2x128xf32>
    %125 = arith.select %121, %124, %119 : vector<2x128xi1>, vector<2x128xf32>
    %cst_46 = arith.constant 5.000000e-01 : f32
    %126 = vector.broadcast %cst_46 : f32 to vector<2x128xf32>
    %127 = arith.mulf %126, %125 : vector<2x128xf32>
    %128 = vector.extract_strided_slice %94 {offsets = [6, 0], sizes = [2, 128], strides = [1, 1]} : vector<16x128xf32> to vector<2x128xf32>
    %129 = arith.addf %127, %128 : vector<2x128xf32>
    %cst_47 = arith.constant 1.000000e+00 : f32
    %130 = vector.broadcast %cst_47 : f32 to vector<2x128xf32>
    %131 = arith.cmpf oge, %129, %130 : vector<2x128xf32>
    %132 = arith.extui %131 : vector<2x128xi1> to vector<2x128xi32>
    %133 = arith.sitofp %132 : vector<2x128xi32> to vector<2x128xf32>
    %cst_48 = arith.constant 0.000000e+00 : f32
    %134 = vector.broadcast %cst_48 : f32 to vector<2x128xf32>
    %135 = arith.select %131, %134, %129 : vector<2x128xi1>, vector<2x128xf32>
    %cst_49 = arith.constant 5.000000e-01 : f32
    %136 = vector.broadcast %cst_49 : f32 to vector<2x128xf32>
    %137 = arith.mulf %136, %135 : vector<2x128xf32>
    %138 = vector.extract_strided_slice %94 {offsets = [8, 0], sizes = [2, 128], strides = [1, 1]} : vector<16x128xf32> to vector<2x128xf32>
    %139 = arith.addf %137, %138 : vector<2x128xf32>
    %cst_50 = arith.constant 1.000000e+00 : f32
    %140 = vector.broadcast %cst_50 : f32 to vector<2x128xf32>
    %141 = arith.cmpf oge, %139, %140 : vector<2x128xf32>
    %142 = arith.extui %141 : vector<2x128xi1> to vector<2x128xi32>
    %143 = arith.sitofp %142 : vector<2x128xi32> to vector<2x128xf32>
    %cst_51 = arith.constant 0.000000e+00 : f32
    %144 = vector.broadcast %cst_51 : f32 to vector<2x128xf32>
    %145 = arith.select %141, %144, %139 : vector<2x128xi1>, vector<2x128xf32>
    %cst_52 = arith.constant 5.000000e-01 : f32
    %146 = vector.broadcast %cst_52 : f32 to vector<2x128xf32>
    %147 = arith.mulf %146, %145 : vector<2x128xf32>
    %148 = vector.extract_strided_slice %94 {offsets = [10, 0], sizes = [2, 128], strides = [1, 1]} : vector<16x128xf32> to vector<2x128xf32>
    %149 = arith.addf %147, %148 : vector<2x128xf32>
    %cst_53 = arith.constant 1.000000e+00 : f32
    %150 = vector.broadcast %cst_53 : f32 to vector<2x128xf32>
    %151 = arith.cmpf oge, %149, %150 : vector<2x128xf32>
    %152 = arith.extui %151 : vector<2x128xi1> to vector<2x128xi32>
    %153 = arith.sitofp %152 : vector<2x128xi32> to vector<2x128xf32>
    %cst_54 = arith.constant 0.000000e+00 : f32
    %154 = vector.broadcast %cst_54 : f32 to vector<2x128xf32>
    %155 = arith.select %151, %154, %149 : vector<2x128xi1>, vector<2x128xf32>
    %cst_55 = arith.constant 5.000000e-01 : f32
    %156 = vector.broadcast %cst_55 : f32 to vector<2x128xf32>
    %157 = arith.mulf %156, %155 : vector<2x128xf32>
    %158 = vector.extract_strided_slice %94 {offsets = [12, 0], sizes = [2, 128], strides = [1, 1]} : vector<16x128xf32> to vector<2x128xf32>
    %159 = arith.addf %157, %158 : vector<2x128xf32>
    %cst_56 = arith.constant 1.000000e+00 : f32
    %160 = vector.broadcast %cst_56 : f32 to vector<2x128xf32>
    %161 = arith.cmpf oge, %159, %160 : vector<2x128xf32>
    %162 = arith.extui %161 : vector<2x128xi1> to vector<2x128xi32>
    %163 = arith.sitofp %162 : vector<2x128xi32> to vector<2x128xf32>
    %cst_57 = arith.constant 0.000000e+00 : f32
    %164 = vector.broadcast %cst_57 : f32 to vector<2x128xf32>
    %165 = arith.select %161, %164, %159 : vector<2x128xi1>, vector<2x128xf32>
    %cst_58 = arith.constant 5.000000e-01 : f32
    %166 = vector.broadcast %cst_58 : f32 to vector<2x128xf32>
    %167 = arith.mulf %166, %165 : vector<2x128xf32>
    %168 = vector.extract_strided_slice %94 {offsets = [14, 0], sizes = [2, 128], strides = [1, 1]} : vector<16x128xf32> to vector<2x128xf32>
    %169 = arith.addf %167, %168 : vector<2x128xf32>
    %cst_59 = arith.constant 1.000000e+00 : f32
    %170 = vector.broadcast %cst_59 : f32 to vector<2x128xf32>
    %171 = arith.cmpf oge, %169, %170 : vector<2x128xf32>
    %172 = arith.extui %171 : vector<2x128xi1> to vector<2x128xi32>
    %173 = arith.sitofp %172 : vector<2x128xi32> to vector<2x128xf32>
    %174 = tpu.concatenate %103, %113, %123, %133, %143, %153, %163, %173 in 0 : vector<2x128xf32>, vector<2x128xf32>, vector<2x128xf32>, vector<2x128xf32>, vector<2x128xf32>, vector<2x128xf32>, vector<2x128xf32>, vector<2x128xf32> -> vector<16x128xf32>
    %c0_60 = arith.constant 0 : index
    %c0_61 = arith.constant 0 : index
    %175 = vector.load %arg6[%c0_60, %c0_61] : memref<128x128xf32, #tpu.memory_space<vmem>>, vector<128x128xf32>
    %cst_62 = arith.constant dense<0.000000e+00> : vector<16x128xf32>
    %176 = tpu.matmul %174, %175, %cst_62 {dimension_numbers = #tpu.dot_dimension_numbers<[1], [0], [0], [1], [0, 0, 1, 1], [], []>} : vector<16x128xf32>, vector<128x128xf32>, vector<16x128xf32> -> vector<16x128xf32>
    %c0_63 = arith.constant 0 : index
    %c0_64 = arith.constant 0 : index
    %177 = vector.load %arg1[%c0_63, %c0_64] : memref<16x128xf32, #tpu.memory_space<vmem>>, vector<16x128xf32>
    %178 = arith.addf %176, %177 : vector<16x128xf32>
    %cst_65 = arith.constant 5.000000e-01 : f32
    %179 = vector.broadcast %cst_65 : f32 to vector<16x128xf32>
    %180 = arith.mulf %178, %179 : vector<16x128xf32>
    %cst_66 = arith.constant 0.000000e+00 : f32
    %181 = vector.broadcast %cst_66 : f32 to vector<2x128xf32>
    %cst_67 = arith.constant 0.000000e+00 : f32
    %182 = vector.broadcast %cst_67 : f32 to vector<2x128xf32>
    %cst_68 = arith.constant 5.000000e-01 : f32
    %183 = vector.broadcast %cst_68 : f32 to vector<2x128xf32>
    %184 = arith.mulf %183, %181 : vector<2x128xf32>
    %185 = vector.extract_strided_slice %180 {offsets = [0, 0], sizes = [2, 128], strides = [1, 1]} : vector<16x128xf32> to vector<2x128xf32>
    %186 = arith.addf %184, %185 : vector<2x128xf32>
    %cst_69 = arith.constant 1.000000e+00 : f32
    %187 = vector.broadcast %cst_69 : f32 to vector<2x128xf32>
    %188 = arith.cmpf oge, %186, %187 : vector<2x128xf32>
    %189 = arith.extui %188 : vector<2x128xi1> to vector<2x128xi32>
    %190 = arith.sitofp %189 : vector<2x128xi32> to vector<2x128xf32>
    %191 = arith.addf %182, %190 : vector<2x128xf32>
    %cst_70 = arith.constant 0.000000e+00 : f32
    %192 = vector.broadcast %cst_70 : f32 to vector<2x128xf32>
    %193 = arith.select %188, %192, %186 : vector<2x128xi1>, vector<2x128xf32>
    %cst_71 = arith.constant 5.000000e-01 : f32
    %194 = vector.broadcast %cst_71 : f32 to vector<2x128xf32>
    %195 = arith.mulf %194, %193 : vector<2x128xf32>
    %196 = vector.extract_strided_slice %180 {offsets = [2, 0], sizes = [2, 128], strides = [1, 1]} : vector<16x128xf32> to vector<2x128xf32>
    %197 = arith.addf %195, %196 : vector<2x128xf32>
    %cst_72 = arith.constant 1.000000e+00 : f32
    %198 = vector.broadcast %cst_72 : f32 to vector<2x128xf32>
    %199 = arith.cmpf oge, %197, %198 : vector<2x128xf32>
    %200 = arith.extui %199 : vector<2x128xi1> to vector<2x128xi32>
    %201 = arith.sitofp %200 : vector<2x128xi32> to vector<2x128xf32>
    %202 = arith.addf %191, %201 : vector<2x128xf32>
    %cst_73 = arith.constant 0.000000e+00 : f32
    %203 = vector.broadcast %cst_73 : f32 to vector<2x128xf32>
    %204 = arith.select %199, %203, %197 : vector<2x128xi1>, vector<2x128xf32>
    %cst_74 = arith.constant 5.000000e-01 : f32
    %205 = vector.broadcast %cst_74 : f32 to vector<2x128xf32>
    %206 = arith.mulf %205, %204 : vector<2x128xf32>
    %207 = vector.extract_strided_slice %180 {offsets = [4, 0], sizes = [2, 128], strides = [1, 1]} : vector<16x128xf32> to vector<2x128xf32>
    %208 = arith.addf %206, %207 : vector<2x128xf32>
    %cst_75 = arith.constant 1.000000e+00 : f32
    %209 = vector.broadcast %cst_75 : f32 to vector<2x128xf32>
    %210 = arith.cmpf oge, %208, %209 : vector<2x128xf32>
    %211 = arith.extui %210 : vector<2x128xi1> to vector<2x128xi32>
    %212 = arith.sitofp %211 : vector<2x128xi32> to vector<2x128xf32>
    %213 = arith.addf %202, %212 : vector<2x128xf32>
    %cst_76 = arith.constant 0.000000e+00 : f32
    %214 = vector.broadcast %cst_76 : f32 to vector<2x128xf32>
    %215 = arith.select %210, %214, %208 : vector<2x128xi1>, vector<2x128xf32>
    %cst_77 = arith.constant 5.000000e-01 : f32
    %216 = vector.broadcast %cst_77 : f32 to vector<2x128xf32>
    %217 = arith.mulf %216, %215 : vector<2x128xf32>
    %218 = vector.extract_strided_slice %180 {offsets = [6, 0], sizes = [2, 128], strides = [1, 1]} : vector<16x128xf32> to vector<2x128xf32>
    %219 = arith.addf %217, %218 : vector<2x128xf32>
    %cst_78 = arith.constant 1.000000e+00 : f32
    %220 = vector.broadcast %cst_78 : f32 to vector<2x128xf32>
    %221 = arith.cmpf oge, %219, %220 : vector<2x128xf32>
    %222 = arith.extui %221 : vector<2x128xi1> to vector<2x128xi32>
    %223 = arith.sitofp %222 : vector<2x128xi32> to vector<2x128xf32>
    %224 = arith.addf %213, %223 : vector<2x128xf32>
    %cst_79 = arith.constant 0.000000e+00 : f32
    %225 = vector.broadcast %cst_79 : f32 to vector<2x128xf32>
    %226 = arith.select %221, %225, %219 : vector<2x128xi1>, vector<2x128xf32>
    %cst_80 = arith.constant 5.000000e-01 : f32
    %227 = vector.broadcast %cst_80 : f32 to vector<2x128xf32>
    %228 = arith.mulf %227, %226 : vector<2x128xf32>
    %229 = vector.extract_strided_slice %180 {offsets = [8, 0], sizes = [2, 128], strides = [1, 1]} : vector<16x128xf32> to vector<2x128xf32>
    %230 = arith.addf %228, %229 : vector<2x128xf32>
    %cst_81 = arith.constant 1.000000e+00 : f32
    %231 = vector.broadcast %cst_81 : f32 to vector<2x128xf32>
    %232 = arith.cmpf oge, %230, %231 : vector<2x128xf32>
    %233 = arith.extui %232 : vector<2x128xi1> to vector<2x128xi32>
    %234 = arith.sitofp %233 : vector<2x128xi32> to vector<2x128xf32>
    %235 = arith.addf %224, %234 : vector<2x128xf32>
    %cst_82 = arith.constant 0.000000e+00 : f32
    %236 = vector.broadcast %cst_82 : f32 to vector<2x128xf32>
    %237 = arith.select %232, %236, %230 : vector<2x128xi1>, vector<2x128xf32>
    %cst_83 = arith.constant 5.000000e-01 : f32
    %238 = vector.broadcast %cst_83 : f32 to vector<2x128xf32>
    %239 = arith.mulf %238, %237 : vector<2x128xf32>
    %240 = vector.extract_strided_slice %180 {offsets = [10, 0], sizes = [2, 128], strides = [1, 1]} : vector<16x128xf32> to vector<2x128xf32>
    %241 = arith.addf %239, %240 : vector<2x128xf32>
    %cst_84 = arith.constant 1.000000e+00 : f32
    %242 = vector.broadcast %cst_84 : f32 to vector<2x128xf32>
    %243 = arith.cmpf oge, %241, %242 : vector<2x128xf32>
    %244 = arith.extui %243 : vector<2x128xi1> to vector<2x128xi32>
    %245 = arith.sitofp %244 : vector<2x128xi32> to vector<2x128xf32>
    %246 = arith.addf %235, %245 : vector<2x128xf32>
    %cst_85 = arith.constant 0.000000e+00 : f32
    %247 = vector.broadcast %cst_85 : f32 to vector<2x128xf32>
    %248 = arith.select %243, %247, %241 : vector<2x128xi1>, vector<2x128xf32>
    %cst_86 = arith.constant 5.000000e-01 : f32
    %249 = vector.broadcast %cst_86 : f32 to vector<2x128xf32>
    %250 = arith.mulf %249, %248 : vector<2x128xf32>
    %251 = vector.extract_strided_slice %180 {offsets = [12, 0], sizes = [2, 128], strides = [1, 1]} : vector<16x128xf32> to vector<2x128xf32>
    %252 = arith.addf %250, %251 : vector<2x128xf32>
    %cst_87 = arith.constant 1.000000e+00 : f32
    %253 = vector.broadcast %cst_87 : f32 to vector<2x128xf32>
    %254 = arith.cmpf oge, %252, %253 : vector<2x128xf32>
    %255 = arith.extui %254 : vector<2x128xi1> to vector<2x128xi32>
    %256 = arith.sitofp %255 : vector<2x128xi32> to vector<2x128xf32>
    %257 = arith.addf %246, %256 : vector<2x128xf32>
    %cst_88 = arith.constant 0.000000e+00 : f32
    %258 = vector.broadcast %cst_88 : f32 to vector<2x128xf32>
    %259 = arith.select %254, %258, %252 : vector<2x128xi1>, vector<2x128xf32>
    %cst_89 = arith.constant 5.000000e-01 : f32
    %260 = vector.broadcast %cst_89 : f32 to vector<2x128xf32>
    %261 = arith.mulf %260, %259 : vector<2x128xf32>
    %262 = vector.extract_strided_slice %180 {offsets = [14, 0], sizes = [2, 128], strides = [1, 1]} : vector<16x128xf32> to vector<2x128xf32>
    %263 = arith.addf %261, %262 : vector<2x128xf32>
    %cst_90 = arith.constant 1.000000e+00 : f32
    %264 = vector.broadcast %cst_90 : f32 to vector<2x128xf32>
    %265 = arith.cmpf oge, %263, %264 : vector<2x128xf32>
    %266 = arith.extui %265 : vector<2x128xi1> to vector<2x128xi32>
    %267 = arith.sitofp %266 : vector<2x128xi32> to vector<2x128xf32>
    %268 = arith.addf %257, %267 : vector<2x128xf32>
    %cst_91 = arith.constant 1.250000e-01 : f32
    %269 = vector.broadcast %cst_91 : f32 to vector<2x128xf32>
    %270 = arith.mulf %268, %269 : vector<2x128xf32>
    %c0_92 = arith.constant 0 : index
    %c0_93 = arith.constant 0 : index
    %271 = vector.load %arg7[%c0_92, %c0_93] : memref<2x128xf32, #tpu.memory_space<vmem>>, vector<2x128xf32>
    tpu.vector_store %arg7[%c0_92, %c0_93], %270 {strides = array<i32>} : memref<2x128xf32, #tpu.memory_space<vmem>>, vector<2x128xf32>,
    return
  }
}

</mosaic_0001>

<llo_original>
// kernel: tpu_custom_call.1
$region0: #{tpu_custom_call.1}
  #allocation0 [shape = 'u32[]', space=smem, size = 0x4, offset = 0x4, fixed_abs, tag = 'smem constant byte address 0x4 - core index']
  #allocation1 [shape = 'u32[144,128]{1,0:T(1,128)}', space=vmem, size = 0x12000, scoped, tag = 'internal scratch']
  %s0 = inlined_call_operand.hbm [shape: f32[16,512], index: 0, kind: input, shape index: {}]
  %s1 = inlined_call_operand.hbm [shape: f32[16,128], index: 1, kind: input, shape index: {}]
  %s2 = inlined_call_operand.hbm [shape: f32[512,256], index: 2, kind: input, shape index: {}]
  %s3 = inlined_call_operand.vmem [shape: f32[1,256], index: 3, kind: input, shape index: {}]
  %s4 = inlined_call_operand.hbm [shape: f32[256,128], index: 4, kind: input, shape index: {}]
  %s5 = inlined_call_operand.vmem [shape: f32[1,128], index: 5, kind: input, shape index: {}]
  %s6 = inlined_call_operand.hbm [shape: f32[128,128], index: 6, kind: input, shape index: {}]
  %s7 = inlined_call_operand.hbm [shape: f32[2,128], index: 7, kind: output, shape index: {}]
  %s8 = sld [smem:[#allocation0]]
  $region58: #{tpu_custom_call.1} parent=0
    _
  %s10 = ssub.s32 1, %s8
  %s11 = scalar_select 0, %s10, %s8
  $region1: #{tpu_custom_call.1} parent=0
    #allocation2 [shape = 'u8[32768]{0}', space=vmem, size = 0x8000, scoped, tag = 'input window, operand 0, single buffered']
    #allocation3 [shape = 's32[1]{0}', space=sflag, size = 0x4, scoped, tag = 'scoped memory for tpu_custom_call.1']
    #allocation4 [shape = 's32[1]{0}', space=sflag, size = 0x4, scoped, tag = 'scoped memory for tpu_custom_call.1']
    #allocation5 [shape = 'u8[8192]{0}', space=vmem, size = 0x2000, scoped, tag = 'input window, operand 1, single buffered']
    #allocation6 [shape = 's32[1]{0}', space=sflag, size = 0x4, scoped, tag = 'scoped memory for tpu_custom_call.1']
    #allocation7 [shape = 'u8[524288]{0}', space=vmem, size = 0x80000, scoped, tag = 'input window, operand 2, single buffered']
    #allocation8 [shape = 'u8[131072]{0}', space=vmem, size = 0x20000, scoped, tag = 'input window, operand 4, single buffered']
    #allocation9 [shape = 's32[1]{0}', space=sflag, size = 0x4, scoped, tag = 'scoped memory for tpu_custom_call.1']
    #allocation10 [shape = 'u8[65536]{0}', space=vmem, size = 0x10000, scoped, tag = 'input window, operand 6, single buffered']
    #allocation11 [shape = 'u8[1024]{0}', space=vmem, size = 0x400, scoped, tag = 'output window, operand 0, single buffered']
    %12 = vsyncpa [#allocation3], 0
    %13 = vsyncpa [#allocation6], 0
    %14 = vsyncpa [#allocation9], 0
    %15 = vsyncpa [#allocation4], 0
    // Predicated region
    $region2: #{tpu_custom_call.1} parent=1 // pred_check
      _
    $region3: #{tpu_custom_call.1} parent=1 // pred_check_branch
      %17 = sbr.rel (0) target = $region5
    $region4: #{tpu_custom_call.1} parent=1 // pred_region
      %s19 = ssub.s32 1024, 1024
      %20 = vsyncadd [#allocation3], %s19
      %s21 = sshll.u32 [#allocation2], 4
      %s22 = int_to_ptr.vmem [resolvable:$true] %s21
      %27 = dma.hbm_to_vmem [thread:$0]  %s0, 1024, %s22, [#allocation3], 512, 512, 32
    $region5: #{tpu_custom_call.1} parent=1 // pred_fallthru
      _
    // Predicated region
    $region6: #{tpu_custom_call.1} parent=1 // pred_check
      _
    $region7: #{tpu_custom_call.1} parent=1 // pred_check_branch
      %29 = sbr.rel (0) target = $region9
    $region8: #{tpu_custom_call.1} parent=1 // pred_region
      %s31 = ssub.s32 256, 256
      %32 = vsyncadd [#allocation6], %s31
      %s33 = sshll.u32 [#allocation5], 4
      %s34 = int_to_ptr.vmem [resolvable:$true] %s33
      %39 = dma.hbm_to_vmem [thread:$0]  %s1, 256, %s34, [#allocation6], 128, 128, 8
    $region9: #{tpu_custom_call.1} parent=1 // pred_fallthru
      _
    // Predicated region
    $region10: #{tpu_custom_call.1} parent=1 // pred_check
      _
    $region11: #{tpu_custom_call.1} parent=1 // pred_check_branch
      %41 = sbr.rel (0) target = $region13
    $region12: #{tpu_custom_call.1} parent=1 // pred_region
      %s43 = ssub.s32 16384, 16384
      %44 = vsyncadd [#allocation6], %s43
      %s45 = sshll.u32 [#allocation7], 4
      %s46 = int_to_ptr.vmem [resolvable:$true] %s45
      %51 = dma.hbm_to_vmem [thread:$0]  %s2, 16384, %s46, [#allocation6], 256, 256, 16
    $region13: #{tpu_custom_call.1} parent=1 // pred_fallthru
      _
    // Predicated region
    $region14: #{tpu_custom_call.1} parent=1 // pred_check
      _
    $region15: #{tpu_custom_call.1} parent=1 // pred_check_branch
      %53 = sbr.rel (0) target = $region17
    $region16: #{tpu_custom_call.1} parent=1 // pred_region
      _
    $region17: #{tpu_custom_call.1} parent=1 // pred_fallthru
      _
    // Predicated region
    $region18: #{tpu_custom_call.1} parent=1 // pred_check
      _
    $region19: #{tpu_custom_call.1} parent=1 // pred_check_branch
      %55 = sbr.rel (0) target = $region21
    $region20: #{tpu_custom_call.1} parent=1 // pred_region
      %s57 = ssub.s32 4096, 4096
      %58 = vsyncadd [#allocation9], %s57
      %s59 = sshll.u32 [#allocation8], 4
      %s60 = int_to_ptr.vmem [resolvable:$true] %s59
      %65 = dma.hbm_to_vmem [thread:$0]  %s4, 4096, %s60, [#allocation9], 128, 128, 8
    $region21: #{tpu_custom_call.1} parent=1 // pred_fallthru
      _
    // Predicated region
    $region22: #{tpu_custom_call.1} parent=1 // pred_check
      _
    $region23: #{tpu_custom_call.1} parent=1 // pred_check_branch
      %67 = sbr.rel (0) target = $region25
    $region24: #{tpu_custom_call.1} parent=1 // pred_region
      _
    $region25: #{tpu_custom_call.1} parent=1 // pred_fallthru
      _
    // Predicated region
    $region26: #{tpu_custom_call.1} parent=1 // pred_check
      _
    $region27: #{tpu_custom_call.1} parent=1 // pred_check_branch
      %69 = sbr.rel (0) target = $region29
    $region28: #{tpu_custom_call.1} parent=1 // pred_region
      %s71 = ssub.s32 2048, 2048
      %72 = vsyncadd [#allocation9], %s71
      %s73 = sshll.u32 [#allocation10], 4
      %s74 = int_to_ptr.vmem [resolvable:$true] %s73
      %79 = dma.hbm_to_vmem [thread:$0]  %s6, 2048, %s74, [#allocation9], 128, 128, 8
    $region29: #{tpu_custom_call.1} parent=1 // pred_fallthru
      _
    // Predicated region
    $region30: #{tpu_custom_call.1} parent=1 // pred_check
      _
    $region31: #{tpu_custom_call.1} parent=1 // pred_check_branch
      %81 = sbr.rel (0) target = $region33
    $region32: #{tpu_custom_call.1} parent=1 // pred_region
      %82 = dma.done [#allocation3], 1024
    $region33: #{tpu_custom_call.1} parent=1 // pred_fallthru
      _
    // Predicated region
    $region34: #{tpu_custom_call.1} parent=1 // pred_check
      _
    $region35: #{tpu_custom_call.1} parent=1 // pred_check_branch
      %84 = sbr.rel (0) target = $region37
    $region36: #{tpu_custom_call.1} parent=1 // pred_region
      %85 = dma.done [#allocation6], 256
    $region37: #{tpu_custom_call.1} parent=1 // pred_fallthru
      _
    // Predicated region
    $region38: #{tpu_custom_call.1} parent=1 // pred_check
      _
    $region39: #{tpu_custom_call.1} parent=1 // pred_check_branch
      %87 = sbr.rel (0) target = $region41
    $region40: #{tpu_custom_call.1} parent=1 // pred_region
      %88 = dma.done [#allocation6], 16384
    $region41: #{tpu_custom_call.1} parent=1 // pred_fallthru
      _
    // Predicated region
    $region42: #{tpu_custom_call.1} parent=1 // pred_check
      _
    $region43: #{tpu_custom_call.1} parent=1 // pred_check_branch
      %90 = sbr.rel (0) target = $region45
    $region44: #{tpu_custom_call.1} parent=1 // pred_region
      %91 = dma.done [#allocation9], 4096
    $region45: #{tpu_custom_call.1} parent=1 // pred_fallthru
      _
    // Predicated region
    $region46: #{tpu_custom_call.1} parent=1 // pred_check
      _
    $region47: #{tpu_custom_call.1} parent=1 // pred_check_branch
      %93 = sbr.rel (0) target = $region49
    $region48: #{tpu_custom_call.1} parent=1 // pred_region
      %94 = dma.done [#allocation9], 2048
    $region49: #{tpu_custom_call.1} parent=1 // pred_fallthru
      _
    %v95 = vld [vmem:[#allocation2] sm:$0xff]
    %v96 = vld [vmem:[#allocation2 + $0x8] sm:$0xff]
    %v97 = vld [vmem:[#allocation2 + $0x10] sm:$0xff]
    %v98 = vld [vmem:[#allocation2 + $0x18] sm:$0xff]
    %v99 = vld [vmem:[#allocation2 + $0x20] sm:$0xff]
    %v100 = vld [vmem:[#allocation2 + $0x28] sm:$0xff]
    %v101 = vld [vmem:[#allocation2 + $0x30] sm:$0xff]
    %v102 = vld [vmem:[#allocation2 + $0x38] sm:$0xff]
    %v103 = vld [vmem:[#allocation7] sm:$0xff]
    %v104 = vld [vmem:[#allocation7 + $0x8] sm:$0xff]
    %v105 = vld [vmem:[#allocation7 + $0x10] sm:$0xff]
    %v106 = vld [vmem:[#allocation7 + $0x18] sm:$0xff]
    %v107 = vld [vmem:[#allocation7 + $0x20] sm:$0xff]
    %v108 = vld [vmem:[#allocation7 + $0x28] sm:$0xff]
    %v109 = vld [vmem:[#allocation7 + $0x30] sm:$0xff]
    %v110 = vld [vmem:[#allocation7 + $0x38] sm:$0xff]
    %v111 = vld [vmem:[#allocation7 + $0x40] sm:$0xff]
    %v112 = vld [vmem:[#allocation7 + $0x48] sm:$0xff]
    %v113 = vld [vmem:[#allocation7 + $0x50] sm:$0xff]
    %v114 = vld [vmem:[#allocation7 + $0x58] sm:$0xff]
    %v115 = vld [vmem:[#allocation7 + $0x60] sm:$0xff]
    %v116 = vld [vmem:[#allocation7 + $0x68] sm:$0xff]
    %v117 = vld [vmem:[#allocation7 + $0x70] sm:$0xff]
    %v118 = vld [vmem:[#allocation7 + $0x78] sm:$0xff]
    %v119 = vld [vmem:[#allocation7 + $0x80] sm:$0xff]
    %v120 = vld [vmem:[#allocation7 + $0x88] sm:$0xff]
    %v121 = vld [vmem:[#allocation7 + $0x90] sm:$0xff]
    %v122 = vld [vmem:[#allocation7 + $0x98] sm:$0xff]
    %v123 = vld [vmem:[#allocation7 + $0xa0] sm:$0xff]
    %v124 = vld [vmem:[#allocation7 + $0xa8] sm:$0xff]
    %v125 = vld [vmem:[#allocation7 + $0xb0] sm:$0xff]
    %v126 = vld [vmem:[#allocation7 + $0xb8] sm:$0xff]
    %v127 = vld [vmem:[#allocation7 + $0xc0] sm:$0xff]
    %v128 = vld [vmem:[#allocation7 + $0xc8] sm:$0xff]
    %v129 = vld [vmem:[#allocation7 + $0xd0] sm:$0xff]
    %v130 = vld [vmem:[#allocation7 + $0xd8] sm:$0xff]
    %v131 = vld [vmem:[#allocation7 + $0xe0] sm:$0xff]
    %v132 = vld [vmem:[#allocation7 + $0xe8] sm:$0xff]
    %v133 = vld [vmem:[#allocation7 + $0xf0] sm:$0xff]
    %v134 = vld [vmem:[#allocation7 + $0xf8] sm:$0xff]
    %v135 = vld [vmem:[#allocation7 + $0x100] sm:$0xff]
    %v136 = vld [vmem:[#allocation7 + $0x108] sm:$0xff]
    %v137 = vld [vmem:[#allocation7 + $0x110] sm:$0xff]
    %v138 = vld [vmem:[#allocation7 + $0x118] sm:$0xff]
    %v139 = vld [vmem:[#allocation7 + $0x120] sm:$0xff]
    %v140 = vld [vmem:[#allocation7 + $0x128] sm:$0xff]
    %v141 = vld [vmem:[#allocation7 + $0x130] sm:$0xff]
    %v142 = vld [vmem:[#allocation7 + $0x138] sm:$0xff]
    %v143 = vld [vmem:[#allocation7 + $0x140] sm:$0xff]
    %v144 = vld [vmem:[#allocation7 + $0x148] sm:$0xff]
    %v145 = vld [vmem:[#allocation7 + $0x150] sm:$0xff]
    %v146 = vld [vmem:[#allocation7 + $0x158] sm:$0xff]
    %v147 = vld [vmem:[#allocation7 + $0x160] sm:$0xff]
    %v148 = vld [vmem:[#allocation7 + $0x168] sm:$0xff]
    %v149 = vld [vmem:[#allocation7 + $0x170] sm:$0xff]
    %v150 = vld [vmem:[#allocation7 + $0x178] sm:$0xff]
    %v151 = vld [vmem:[#allocation7 + $0x180] sm:$0xff]
    %v152 = vld [vmem:[#allocation7 + $0x188] sm:$0xff]
    %v153 = vld [vmem:[#allocation7 + $0x190] sm:$0xff]
    %v154 = vld [vmem:[#allocation7 + $0x198] sm:$0xff]
    %v155 = vld [vmem:[#allocation7 + $0x1a0] sm:$0xff]
    %v156 = vld [vmem:[#allocation7 + $0x1a8] sm:$0xff]
    %v157 = vld [vmem:[#allocation7 + $0x1b0] sm:$0xff]
    %v158 = vld [vmem:[#allocation7 + $0x1b8] sm:$0xff]
    %v159 = vld [vmem:[#allocation7 + $0x1c0] sm:$0xff]
    %v160 = vld [vmem:[#allocation7 + $0x1c8] sm:$0xff]
    %v161 = vld [vmem:[#allocation7 + $0x1d0] sm:$0xff]
    %v162 = vld [vmem:[#allocation7 + $0x1d8] sm:$0xff]
    %v163 = vld [vmem:[#allocation7 + $0x1e0] sm:$0xff]
    %v164 = vld [vmem:[#allocation7 + $0x1e8] sm:$0xff]
    %v165 = vld [vmem:[#allocation7 + $0x1f0] sm:$0xff]
    %v166 = vld [vmem:[#allocation7 + $0x1f8] sm:$0xff]
    %v167 = vld [vmem:[#allocation7 + $0x200] sm:$0xff]
    %v168 = vld [vmem:[#allocation7 + $0x208] sm:$0xff]
    %v169 = vld [vmem:[#allocation7 + $0x210] sm:$0xff]
    %v170 = vld [vmem:[#allocation7 + $0x218] sm:$0xff]
    %v171 = vld [vmem:[#allocation7 + $0x220] sm:$0xff]
    %v172 = vld [vmem:[#allocation7 + $0x228] sm:$0xff]
    %v173 = vld [vmem:[#allocation7 + $0x230] sm:$0xff]
    %v174 = vld [vmem:[#allocation7 + $0x238] sm:$0xff]
    %v175 = vld [vmem:[#allocation7 + $0x240] sm:$0xff]
    %v176 = vld [vmem:[#allocation7 + $0x248] sm:$0xff]
    %v177 = vld [vmem:[#allocation7 + $0x250] sm:$0xff]
    %v178 = vld [vmem:[#allocation7 + $0x258] sm:$0xff]
    %v179 = vld [vmem:[#allocation7 + $0x260] sm:$0xff]
    %v180 = vld [vmem:[#allocation7 + $0x268] sm:$0xff]
    %v181 = vld [vmem:[#allocation7 + $0x270] sm:$0xff]
    %v182 = vld [vmem:[#allocation7 + $0x278] sm:$0xff]
    %v183 = vld [vmem:[#allocation7 + $0x280] sm:$0xff]
    %v184 = vld [vmem:[#allocation7 + $0x288] sm:$0xff]
    %v185 = vld [vmem:[#allocation7 + $0x290] sm:$0xff]
    %v186 = vld [vmem:[#allocation7 + $0x298] sm:$0xff]
    %v187 = vld [vmem:[#allocation7 + $0x2a0] sm:$0xff]
    %v188 = vld [vmem:[#allocation7 + $0x2a8] sm:$0xff]
    %v189 = vld [vmem:[#allocation7 + $0x2b0] sm:$0xff]
    %v190 = vld [vmem:[#allocation7 + $0x2b8] sm:$0xff]
    %v191 = vld [vmem:[#allocation7 + $0x2c0] sm:$0xff]
    %v192 = vld [vmem:[#allocation7 + $0x2c8] sm:$0xff]
    %v193 = vld [vmem:[#allocation7 + $0x2d0] sm:$0xff]
    %v194 = vld [vmem:[#allocation7 + $0x2d8] sm:$0xff]
    %v195 = vld [vmem:[#allocation7 + $0x2e0] sm:$0xff]
    %v196 = vld [vmem:[#allocation7 + $0x2e8] sm:$0xff]
    %v197 = vld [vmem:[#allocation7 + $0x2f0] sm:$0xff]
    %v198 = vld [vmem:[#allocation7 + $0x2f8] sm:$0xff]
    %v199 = vld [vmem:[#allocation7 + $0x300] sm:$0xff]
    %v200 = vld [vmem:[#allocation7 + $0x308] sm:$0xff]
    %v201 = vld [vmem:[#allocation7 + $0x310] sm:$0xff]
    %v202 = vld [vmem:[#allocation7 + $0x318] sm:$0xff]
    %v203 = vld [vmem:[#allocation7 + $0x320] sm:$0xff]
    %v204 = vld [vmem:[#allocation7 + $0x328] sm:$0xff]
    %v205 = vld [vmem:[#allocation7 + $0x330] sm:$0xff]
    %v206 = vld [vmem:[#allocation7 + $0x338] sm:$0xff]
    %v207 = vld [vmem:[#allocation7 + $0x340] sm:$0xff]
    %v208 = vld [vmem:[#allocation7 + $0x348] sm:$0xff]
    %v209 = vld [vmem:[#allocation7 + $0x350] sm:$0xff]
    %v210 = vld [vmem:[#allocation7 + $0x358] sm:$0xff]
    %v211 = vld [vmem:[#allocation7 + $0x360] sm:$0xff]
    %v212 = vld [vmem:[#allocation7 + $0x368] sm:$0xff]
    %v213 = vld [vmem:[#allocation7 + $0x370] sm:$0xff]
    %v214 = vld [vmem:[#allocation7 + $0x378] sm:$0xff]
    %v215 = vld [vmem:[#allocation7 + $0x380] sm:$0xff]
    %v216 = vld [vmem:[#allocation7 + $0x388] sm:$0xff]
    %v217 = vld [vmem:[#allocation7 + $0x390] sm:$0xff]
    %v218 = vld [vmem:[#allocation7 + $0x398] sm:$0xff]
    %v219 = vld [vmem:[#allocation7 + $0x3a0] sm:$0xff]
    %v220 = vld [vmem:[#allocation7 + $0x3a8] sm:$0xff]
    %v221 = vld [vmem:[#allocation7 + $0x3b0] sm:$0xff]
    %v222 = vld [vmem:[#allocation7 + $0x3b8] sm:$0xff]
    %v223 = vld [vmem:[#allocation7 + $0x3c0] sm:$0xff]
    %v224 = vld [vmem:[#allocation7 + $0x3c8] sm:$0xff]
    %v225 = vld [vmem:[#allocation7 + $0x3d0] sm:$0xff]
    %v226 = vld [vmem:[#allocation7 + $0x3d8] sm:$0xff]
    %v227 = vld [vmem:[#allocation7 + $0x3e0] sm:$0xff]
    %v228 = vld [vmem:[#allocation7 + $0x3e8] sm:$0xff]
    %v229 = vld [vmem:[#allocation7 + $0x3f0] sm:$0xff]
    %v230 = vld [vmem:[#allocation7 + $0x3f8] sm:$0xff]
    %v231 = vld [vmem:[%s3] sm:$0x3]
    %v233 = vlaneseq
    %v234 = vshrl.u32 %v233, 7
    %v235 = vsub.s32 0, %v234
    %v236 = vrot.slane %v231, %v235
    %v237 = vlaneseq
    %v238 = vshrl.u32 %v237, 7
    %v239 = vsub.s32 1, %v238
    %v240 = vrot.slane %v231, %v239
    %243 = vmatprep.subr.mxu0 %v104
    %244 = vmatpush1.msra.mxu0 %v103
    %245 = vmatprep.subr.mxu0 %v106
    %246 = vmatpush1.msra.mxu0 %v105
    %247 = vmatprep.subr.mxu0 %v108
    %248 = vmatpush1.msra.mxu0 %v107
    %249 = vmatprep.subr.mxu0 %v110
    %250 = vmatpush1.msra.mxu0 %v109
    %251 = vmatprep.subr.mxu0 %v112
    %252 = vmatpush1.msra.mxu0 %v111
    %253 = vmatprep.subr.mxu0 %v114
    %254 = vmatpush1.msra.mxu0 %v113
    %255 = vmatprep.subr.mxu0 %v116
    %256 = vmatpush1.msra.mxu0 %v115
    %257 = vmatprep.subr.mxu0 %v118
    %258 = vmatpush1.msra.mxu0 %v117
    %259 = vmatprep.subr.mxu0 %v120
    %260 = vmatpush1.msra.mxu0 %v119
    %261 = vmatprep.subr.mxu0 %v122
    %262 = vmatpush1.msra.mxu0 %v121
    %263 = vmatprep.subr.mxu0 %v124
    %264 = vmatpush1.msra.mxu0 %v123
    %265 = vmatprep.subr.mxu0 %v126
    %266 = vmatpush1.msra.mxu0 %v125
    %267 = vmatprep.subr.mxu0 %v128
    %268 = vmatpush1.msra.mxu0 %v127
    %269 = vmatprep.subr.mxu0 %v130
    %270 = vmatpush1.msra.mxu0 %v129
    %271 = vmatprep.subr.mxu0 %v132
    %272 = vmatpush1.msra.mxu0 %v131
    %273 = vmatprep.subr.mxu0 %v134
    %274 = vmatpush1.msra.mxu0 %v133
    %275 = vmatprep.subr.mxu0 %v136
    %276 = vmatpush1.msra.mxu0 %v135
    %277 = vmatprep.subr.mxu0 %v138
    %278 = vmatpush1.msra.mxu0 %v137
    %279 = vmatprep.subr.mxu0 %v140
    %280 = vmatpush1.msra.mxu0 %v139
    %281 = vmatprep.subr.mxu0 %v142
    %282 = vmatpush1.msra.mxu0 %v141
    %283 = vmatprep.subr.mxu0 %v144
    %284 = vmatpush1.msra.mxu0 %v143
    %285 = vmatprep.subr.mxu0 %v146
    %286 = vmatpush1.msra.mxu0 %v145
    %287 = vmatprep.subr.mxu0 %v148
    %288 = vmatpush1.msra.mxu0 %v147
    %289 = vmatprep.subr.mxu0 %v150
    %290 = vmatpush1.msra.mxu0 %v149
    %291 = vmatprep.subr.mxu0 %v152
    %292 = vmatpush1.msra.mxu0 %v151
    %293 = vmatprep.subr.mxu0 %v154
    %294 = vmatpush1.msra.mxu0 %v153
    %295 = vmatprep.subr.mxu0 %v156
    %296 = vmatpush1.msra.mxu0 %v155
    %297 = vmatprep.subr.mxu0 %v158
    %298 = vmatpush1.msra.mxu0 %v157
    %299 = vmatprep.subr.mxu0 %v160
    %300 = vmatpush1.msra.mxu0 %v159
    %301 = vmatprep.subr.mxu0 %v162
    %302 = vmatpush1.msra.mxu0 %v161
    %303 = vmatprep.subr.mxu0 %v164
    %304 = vmatpush1.msra.mxu0 %v163
    %305 = vmatprep.subr.mxu0 %v166
    %306 = vmatpush1.msra.mxu0 %v165
    %307 = vmatprep.mubr.f32.mxu0 %v96
    %308 = vmatmul.mubr.f32.gmra.mrb[0].mxu0 %v95
    %v309 = vpop.f32.mrb[0].mxu0
    %v310 = vadd.f32 %v236, %v309
    %v311 = vpop.f32.mrb[0].mxu0
    %v312 = vadd.f32 %v240, %v311
    %313 = vmatprep.mubr.f32.mxu0 %v100
    %314 = vmatmul.mubr.f32.gmra.mrb[0].mxu0 %v99
    %v315 = vpop.f32.mrb[0].mxu0
    %v316 = vadd.f32 %v236, %v315
    %v317 = vpop.f32.mrb[0].mxu0
    %v318 = vadd.f32 %v240, %v317
    %319 = vdwg.mxu0
    %320 = vmatprep.subr.mxu0 %v168
    %321 = vmatpush1.msra.mxu0 %v167
    %322 = vmatprep.subr.mxu0 %v170
    %323 = vmatpush1.msra.mxu0 %v169
    %324 = vmatprep.subr.mxu0 %v172
    %325 = vmatpush1.msra.mxu0 %v171
    %326 = vmatprep.subr.mxu0 %v174
    %327 = vmatpush1.msra.mxu0 %v173
    %328 = vmatprep.subr.mxu0 %v176
    %329 = vmatpush1.msra.mxu0 %v175
    %330 = vmatprep.subr.mxu0 %v178
    %331 = vmatpush1.msra.mxu0 %v177
    %332 = vmatprep.subr.mxu0 %v180
    %333 = vmatpush1.msra.mxu0 %v179
    %334 = vmatprep.subr.mxu0 %v182
    %335 = vmatpush1.msra.mxu0 %v181
    %336 = vmatprep.subr.mxu0 %v184
    %337 = vmatpush1.msra.mxu0 %v183
    %338 = vmatprep.subr.mxu0 %v186
    %339 = vmatpush1.msra.mxu0 %v185
    %340 = vmatprep.subr.mxu0 %v188
    %341 = vmatpush1.msra.mxu0 %v187
    %342 = vmatprep.subr.mxu0 %v190
    %343 = vmatpush1.msra.mxu0 %v189
    %344 = vmatprep.subr.mxu0 %v192
    %345 = vmatpush1.msra.mxu0 %v191
    %346 = vmatprep.subr.mxu0 %v194
    %347 = vmatpush1.msra.mxu0 %v193
    %348 = vmatprep.subr.mxu0 %v196
    %349 = vmatpush1.msra.mxu0 %v195
    %350 = vmatprep.subr.mxu0 %v198
    %351 = vmatpush1.msra.mxu0 %v197
    %352 = vmatprep.subr.mxu0 %v200
    %353 = vmatpush1.msra.mxu0 %v199
    %354 = vmatprep.subr.mxu0 %v202
    %355 = vmatpush1.msra.mxu0 %v201
    %356 = vmatprep.subr.mxu0 %v204
    %357 = vmatpush1.msra.mxu0 %v203
    %358 = vmatprep.subr.mxu0 %v206
    %359 = vmatpush1.msra.mxu0 %v205
    %360 = vmatprep.subr.mxu0 %v208
    %361 = vmatpush1.msra.mxu0 %v207
    %362 = vmatprep.subr.mxu0 %v210
    %363 = vmatpush1.msra.mxu0 %v209
    %364 = vmatprep.subr.mxu0 %v212
    %365 = vmatpush1.msra.mxu0 %v211
    %366 = vmatprep.subr.mxu0 %v214
    %367 = vmatpush1.msra.mxu0 %v213
    %368 = vmatprep.subr.mxu0 %v216
    %369 = vmatpush1.msra.mxu0 %v215
    %370 = vmatprep.subr.mxu0 %v218
    %371 = vmatpush1.msra.mxu0 %v217
    %372 = vmatprep.subr.mxu0 %v220
    %373 = vmatpush1.msra.mxu0 %v219
    %374 = vmatprep.subr.mxu0 %v222
    %375 = vmatpush1.msra.mxu0 %v221
    %376 = vmatprep.subr.mxu0 %v224
    %377 = vmatpush1.msra.mxu0 %v223
    %378 = vmatprep.subr.mxu0 %v226
    %379 = vmatpush1.msra.mxu0 %v225
    %380 = vmatprep.subr.mxu0 %v228
    %381 = vmatpush1.msra.mxu0 %v227
    %382 = vmatprep.subr.mxu0 %v230
    %383 = vmatpush1.msra.mxu0 %v229
    %384 = vmatprep.mubr.f32.mxu0 %v98
    %385 = vmatmul.mubr.f32.gmra.mrb[0].mxu0 %v97
    %v386 = vpop.f32.mrb[0].mxu0
    %v387 = vadd.f32 %v310, %v386
    %v388 = vpop.f32.mrb[0].mxu0
    %v389 = vadd.f32 %v312, %v388
    %390 = vmatprep.mubr.f32.mxu0 %v102
    %391 = vmatmul.mubr.f32.gmra.mrb[0].mxu0 %v101
    %v392 = vpop.f32.mrb[0].mxu0
    %v393 = vadd.f32 %v316, %v392
    %v394 = vpop.f32.mrb[0].mxu0
    %v395 = vadd.f32 %v318, %v394
    %396 = vdwg.mxu0
    %v397 = vmul.f32 %v387, 0.5
    %v398 = vmul.f32 %v389, 0.5
    %v399 = vmul.f32 %v393, 0.5
    %v400 = vmul.f32 %v395, 0.5
    %v401 = vadd.f32 %v397, 0.0
    %v402 = vadd.f32 %v398, 0.0
    %vm403 = vcmp.ge.f32.partialorder %v401, 1.0
    %vm404 = vcmp.ge.f32.partialorder %v402, 1.0
    %v405 = vsel %vm403, 1, 0
    %v406 = vsel %vm404, 1, 0
    %v407 = vcvt.s32.f32 %v405
    %v408 = vcvt.s32.f32 %v406
    %v409 = vsel %vm403, 0.0, %v401
    %v410 = vsel %vm404, 0.0, %v402
    %v411 = vmul.f32 %v409, 0.5
    %v412 = vmul.f32 %v410, 0.5
    %v415 = vrot.slane %v397, 2
    %v416 = vrot.slane %v398, 2
    %v419 = vadd.f32 %v411, %v415
    %v420 = vadd.f32 %v412, %v416
    %vm421 = vcmp.ge.f32.partialorder %v419, 1.0
    %vm422 = vcmp.ge.f32.partialorder %v420, 1.0
    %v423 = vsel %vm421, 1, 0
    %v424 = vsel %vm422, 1, 0
    %v425 = vcvt.s32.f32 %v423
    %v426 = vcvt.s32.f32 %v424
    %v427 = vsel %vm421, 0.0, %v419
    %v428 = vsel %vm422, 0.0, %v420
    %v429 = vmul.f32 %v427, 0.5
    %v430 = vmul.f32 %v428, 0.5
    %v431 = vrot.slane %v397, 4
    %v432 = vrot.slane %v398, 4
    %v435 = vadd.f32 %v429, %v431
    %v436 = vadd.f32 %v430, %v432
    %vm437 = vcmp.ge.f32.partialorder %v435, 1.0
    %vm438 = vcmp.ge.f32.partialorder %v436, 1.0
    %v439 = vsel %vm437, 1, 0
    %v440 = vsel %vm438, 1, 0
    %v441 = vcvt.s32.f32 %v439
    %v442 = vcvt.s32.f32 %v440
    %v443 = vsel %vm437, 0.0, %v435
    %v444 = vsel %vm438, 0.0, %v436
    %v445 = vmul.f32 %v443, 0.5
    %v446 = vmul.f32 %v444, 0.5
    %v447 = vrot.slane %v397, 6
    %v448 = vrot.slane %v398, 6
    %v451 = vadd.f32 %v445, %v447
    %v452 = vadd.f32 %v446, %v448
    %vm453 = vcmp.ge.f32.partialorder %v451, 1.0
    %vm454 = vcmp.ge.f32.partialorder %v452, 1.0
    %v455 = vsel %vm453, 1, 0
    %v456 = vsel %vm454, 1, 0
    %v457 = vcvt.s32.f32 %v455
    %v458 = vcvt.s32.f32 %v456
    %v459 = vsel %vm453, 0.0, %v451
    %v460 = vsel %vm454, 0.0, %v452
    %v461 = vmul.f32 %v459, 0.5
    %v462 = vmul.f32 %v460, 0.5
    %v463 = vadd.f32 %v461, %v399
    %v464 = vadd.f32 %v462, %v400
    %vm465 = vcmp.ge.f32.partialorder %v463, 1.0
    %vm466 = vcmp.ge.f32.partialorder %v464, 1.0
    %v467 = vsel %vm465, 1, 0
    %v468 = vsel %vm466, 1, 0
    %v469 = vcvt.s32.f32 %v467
    %v470 = vcvt.s32.f32 %v468
    %v471 = vsel %vm465, 0.0, %v463
    %v472 = vsel %vm466, 0.0, %v464
    %v473 = vmul.f32 %v471, 0.5
    %v474 = vmul.f32 %v472, 0.5
    %v477 = vrot.slane %v399, 2
    %v478 = vrot.slane %v400, 2
    %v481 = vadd.f32 %v473, %v477
    %v482 = vadd.f32 %v474, %v478
    %vm483 = vcmp.ge.f32.partialorder %v481, 1.0
    %vm484 = vcmp.ge.f32.partialorder %v482, 1.0
    %v485 = vsel %vm483, 1, 0
    %v486 = vsel %vm484, 1, 0
    %v487 = vcvt.s32.f32 %v485
    %v488 = vcvt.s32.f32 %v486
    %v489 = vsel %vm483, 0.0, %v481
    %v490 = vsel %vm484, 0.0, %v482
    %v491 = vmul.f32 %v489, 0.5
    %v492 = vmul.f32 %v490, 0.5
    %v493 = vrot.slane %v399, 4
    %v494 = vrot.slane %v400, 4
    %v497 = vadd.f32 %v491, %v493
    %v498 = vadd.f32 %v492, %v494
    %vm499 = vcmp.ge.f32.partialorder %v497, 1.0
    %vm500 = vcmp.ge.f32.partialorder %v498, 1.0
    %v501 = vsel %vm499, 1, 0
    %v502 = vsel %vm500, 1, 0
    %v503 = vcvt.s32.f32 %v501
    %v504 = vcvt.s32.f32 %v502
    %v505 = vsel %vm499, 0.0, %v497
    %v506 = vsel %vm500, 0.0, %v498
    %v507 = vmul.f32 %v505, 0.5
    %v508 = vmul.f32 %v506, 0.5
    %v509 = vrot.slane %v399, 6
    %v510 = vrot.slane %v400, 6
    %v513 = vadd.f32 %v507, %v509
    %v514 = vadd.f32 %v508, %v510
    %vm515 = vcmp.ge.f32.partialorder %v513, 1.0
    %vm516 = vcmp.ge.f32.partialorder %v514, 1.0
    %v517 = vsel %vm515, 1, 0
    %v518 = vsel %vm516, 1, 0
    %v519 = vcvt.s32.f32 %v517
    %v520 = vcvt.s32.f32 %v518
    %v523 = vrot.slane %v425, 6
    %v524 = vrot.slane %v426, 6
    %v529 = vrot.slane %v441, 4
    %v530 = vrot.slane %v442, 4
    %v535 = vrot.slane %v457, 2
    %v536 = vrot.slane %v458, 2
    %v541 = vrot.slane %v487, 6
    %v542 = vrot.slane %v488, 6
    %v547 = vrot.slane %v503, 4
    %v548 = vrot.slane %v504, 4
    %v553 = vrot.slane %v519, 2
    %v554 = vrot.slane %v520, 2
    %vm557 = vcmask 1041408
    %v558 = vsel %vm557, %v407, %v523
    %v559 = vsel %vm557, %v408, %v524
    %vm560 = vcmask 1043456
    %v561 = vsel %vm560, %v558, %v529
    %v562 = vsel %vm560, %v559, %v530
    %vm563 = vcmask 1045504
    %v564 = vsel %vm563, %v561, %v535
    %v565 = vsel %vm563, %v562, %v536
    %v566 = vsel %vm557, %v469, %v541
    %v567 = vsel %vm557, %v470, %v542
    %v568 = vsel %vm560, %v566, %v547
    %v569 = vsel %vm560, %v567, %v548
    %v570 = vsel %vm563, %v568, %v553
    %v571 = vsel %vm563, %v569, %v554
    %v572 = vld [vmem:[#allocation8] sm:$0xff]
    %v573 = vld [vmem:[#allocation8 + $0x8] sm:$0xff]
    %v574 = vld [vmem:[#allocation8 + $0x10] sm:$0xff]
    %v575 = vld [vmem:[#allocation8 + $0x18] sm:$0xff]
    %v576 = vld [vmem:[#allocation8 + $0x20] sm:$0xff]
    %v577 = vld [vmem:[#allocation8 + $0x28] sm:$0xff]
    %v578 = vld [vmem:[#allocation8 + $0x30] sm:$0xff]
    %v579 = vld [vmem:[#allocation8 + $0x38] sm:$0xff]
    %v580 = vld [vmem:[#allocation8 + $0x40] sm:$0xff]
    %v581 = vld [vmem:[#allocation8 + $0x48] sm:$0xff]
    %v582 = vld [vmem:[#allocation8 + $0x50] sm:$0xff]
    %v583 = vld [vmem:[#allocation8 + $0x58] sm:$0xff]
    %v584 = vld [vmem:[#allocation8 + $0x60] sm:$0xff]
    %v585 = vld [vmem:[#allocation8 + $0x68] sm:$0xff]
    %v586 = vld [vmem:[#allocation8 + $0x70] sm:$0xff]
    %v587 = vld [vmem:[#allocation8 + $0x78] sm:$0xff]
    %v588 = vld [vmem:[#allocation8 + $0x80] sm:$0xff]
    %v589 = vld [vmem:[#allocation8 + $0x88] sm:$0xff]
    %v590 = vld [vmem:[#allocation8 + $0x90] sm:$0xff]
    %v591 = vld [vmem:[#allocation8 + $0x98] sm:$0xff]
    %v592 = vld [vmem:[#allocation8 + $0xa0] sm:$0xff]
    %v593 = vld [vmem:[#allocation8 + $0xa8] sm:$0xff]
    %v594 = vld [vmem:[#allocation8 + $0xb0] sm:$0xff]
    %v595 = vld [vmem:[#allocation8 + $0xb8] sm:$0xff]
    %v596 = vld [vmem:[#allocation8 + $0xc0] sm:$0xff]
    %v597 = vld [vmem:[#allocation8 + $0xc8] sm:$0xff]
    %v598 = vld [vmem:[#allocation8 + $0xd0] sm:$0xff]
    %v599 = vld [vmem:[#allocation8 + $0xd8] sm:$0xff]
    %v600 = vld [vmem:[#allocation8 + $0xe0] sm:$0xff]
    %v601 = vld [vmem:[#allocation8 + $0xe8] sm:$0xff]
    %v602 = vld [vmem:[#allocation8 + $0xf0] sm:$0xff]
    %v603 = vld [vmem:[#allocation8 + $0xf8] sm:$0xff]
    %v604 = vld [vmem:[%s5] sm:$0x1]
    %v606 = vlaneseq
    %v607 = vshrl.u32 %v606, 7
    %v608 = vsub.s32 0, %v607
    %v609 = vrot.slane %v604, %v608
    %611 = vmatprep.subr.mxu0 0.0
    %612 = vmatpush1.msra.mxu0 %v572
    %613 = vmatprep.subr.mxu0 0.0
    %614 = vmatpush1.msra.mxu0 %v573
    %615 = vmatprep.subr.mxu0 0.0
    %616 = vmatpush1.msra.mxu0 %v574
    %617 = vmatprep.subr.mxu0 0.0
    %618 = vmatpush1.msra.mxu0 %v575
    %619 = vmatprep.subr.mxu0 0.0
    %620 = vmatpush1.msra.mxu0 %v576
    %621 = vmatprep.subr.mxu0 0.0
    %622 = vmatpush1.msra.mxu0 %v577
    %623 = vmatprep.subr.mxu0 0.0
    %624 = vmatpush1.msra.mxu0 %v578
    %625 = vmatprep.subr.mxu0 0.0
    %626 = vmatpush1.msra.mxu0 %v579
    %627 = vmatprep.subr.mxu0 0.0
    %628 = vmatpush1.msra.mxu0 %v580
    %629 = vmatprep.subr.mxu0 0.0
    %630 = vmatpush1.msra.mxu0 %v581
    %631 = vmatprep.subr.mxu0 0.0
    %632 = vmatpush1.msra.mxu0 %v582
    %633 = vmatprep.subr.mxu0 0.0
    %634 = vmatpush1.msra.mxu0 %v583
    %635 = vmatprep.subr.mxu0 0.0
    %636 = vmatpush1.msra.mxu0 %v584
    %637 = vmatprep.subr.mxu0 0.0
    %638 = vmatpush1.msra.mxu0 %v585
    %639 = vmatprep.subr.mxu0 0.0
    %640 = vmatpush1.msra.mxu0 %v586
    %641 = vmatprep.subr.mxu0 0.0
    %642 = vmatpush1.msra.mxu0 %v587
    %643 = vmatprep.subr.mxu0 0.0
    %644 = vmatpush1.msra.mxu0 %v588
    %645 = vmatprep.subr.mxu0 0.0
    %646 = vmatpush1.msra.mxu0 %v589
    %647 = vmatprep.subr.mxu0 0.0
    %648 = vmatpush1.msra.mxu0 %v590
    %649 = vmatprep.subr.mxu0 0.0
    %650 = vmatpush1.msra.mxu0 %v591
    %651 = vmatprep.subr.mxu0 0.0
    %652 = vmatpush1.msra.mxu0 %v592
    %653 = vmatprep.subr.mxu0 0.0
    %654 = vmatpush1.msra.mxu0 %v593
    %655 = vmatprep.subr.mxu0 0.0
    %656 = vmatpush1.msra.mxu0 %v594
    %657 = vmatprep.subr.mxu0 0.0
    %658 = vmatpush1.msra.mxu0 %v595
    %659 = vmatprep.subr.mxu0 0.0
    %660 = vmatpush1.msra.mxu0 %v596
    %661 = vmatprep.subr.mxu0 0.0
    %662 = vmatpush1.msra.mxu0 %v597
    %663 = vmatprep.subr.mxu0 0.0
    %664 = vmatpush1.msra.mxu0 %v598
    %665 = vmatprep.subr.mxu0 0.0
    %666 = vmatpush1.msra.mxu0 %v599
    %667 = vmatprep.subr.mxu0 0.0
    %668 = vmatpush1.msra.mxu0 %v600
    %669 = vmatprep.subr.mxu0 0.0
    %670 = vmatpush1.msra.mxu0 %v601
    %671 = vmatprep.subr.mxu0 0.0
    %672 = vmatpush1.msra.mxu0 %v602
    %673 = vmatprep.subr.mxu0 0.0
    %674 = vmatpush1.msra.mxu0 %v603
    %675 = vmatprep.mubr.f32.mxu0 %v565
    %676 = vmatmul.mubr.f32.gmra.mrb[0].mxu0 %v564
    %v677 = vpop.f32.mrb[0].mxu0
    %v678 = vadd.f32 %v609, %v677
    %v679 = vpop.f32.mrb[0].mxu0
    %680 = vmatprep.mubr.f32.mxu0 %v571
    %681 = vmatmul.mubr.f32.gmra.mrb[0].mxu0 %v570
    %v682 = vpop.f32.mrb[0].mxu0
    %v683 = vadd.f32 %v609, %v682
    %v684 = vpop.f32.mrb[0].mxu0
    %685 = vdwg.mxu0
    %v686 = vmul.f32 %v678, 0.5
    %v687 = vmul.f32 %v683, 0.5
    %v688 = vadd.f32 %v686, 0.0
    %vm689 = vcmp.ge.f32.partialorder %v688, 1.0
    %v690 = vsel %vm689, 1, 0
    %v691 = vcvt.s32.f32 %v690
    %v692 = vsel %vm689, 0.0, %v688
    %v693 = vmul.f32 %v692, 0.5
    %v695 = vrot.slane %v686, 2
    %v697 = vadd.f32 %v693, %v695
    %vm698 = vcmp.ge.f32.partialorder %v697, 1.0
    %v699 = vsel %vm698, 1, 0
    %v700 = vcvt.s32.f32 %v699
    %v701 = vsel %vm698, 0.0, %v697
    %v702 = vmul.f32 %v701, 0.5
    %v703 = vrot.slane %v686, 4
    %v705 = vadd.f32 %v702, %v703
    %vm706 = vcmp.ge.f32.partialorder %v705, 1.0
    %v707 = vsel %vm706, 1, 0
    %v708 = vcvt.s32.f32 %v707
    %v709 = vsel %vm706, 0.0, %v705
    %v710 = vmul.f32 %v709, 0.5
    %v711 = vrot.slane %v686, 6
    %v713 = vadd.f32 %v710, %v711
    %vm714 = vcmp.ge.f32.partialorder %v713, 1.0
    %v715 = vsel %vm714, 1, 0
    %v716 = vcvt.s32.f32 %v715
    %v717 = vsel %vm714, 0.0, %v713
    %v718 = vmul.f32 %v717, 0.5
    %v719 = vadd.f32 %v718, %v687
    %vm720 = vcmp.ge.f32.partialorder %v719, 1.0
    %v721 = vsel %vm720, 1, 0
    %v722 = vcvt.s32.f32 %v721
    %v723 = vsel %vm720, 0.0, %v719
    %v724 = vmul.f32 %v723, 0.5
    %v726 = vrot.slane %v687, 2
    %v728 = vadd.f32 %v724, %v726
    %vm729 = vcmp.ge.f32.partialorder %v728, 1.0
    %v730 = vsel %vm729, 1, 0
    %v731 = vcvt.s32.f32 %v730
    %v732 = vsel %vm729, 0.0, %v728
    %v733 = vmul.f32 %v732, 0.5
    %v734 = vrot.slane %v687, 4
    %v736 = vadd.f32 %v733, %v734
    %vm737 = vcmp.ge.f32.partialorder %v736, 1.0
    %v738 = vsel %vm737, 1, 0
    %v739 = vcvt.s32.f32 %v738
    %v740 = vsel %vm737, 0.0, %v736
    %v741 = vmul.f32 %v740, 0.5
    %v742 = vrot.slane %v687, 6
    %v744 = vadd.f32 %v741, %v742
    %vm745 = vcmp.ge.f32.partialorder %v744, 1.0
    %v746 = vsel %vm745, 1, 0
    %v747 = vcvt.s32.f32 %v746
    %v749 = vrot.slane %v700, 6
    %v752 = vrot.slane %v708, 4
    %v755 = vrot.slane %v716, 2
    %v758 = vrot.slane %v731, 6
    %v761 = vrot.slane %v739, 4
    %v764 = vrot.slane %v747, 2
    %v766 = vsel %vm557, %v691, %v749
    %v767 = vsel %vm560, %v766, %v752
    %v768 = vsel %vm563, %v767, %v755
    %v769 = vsel %vm557, %v722, %v758
    %v770 = vsel %vm560, %v769, %v761
    %v771 = vsel %vm563, %v770, %v764
    %v772 = vld [vmem:[#allocation10] sm:$0xff]
    %v773 = vld [vmem:[#allocation10 + $0x8] sm:$0xff]
    %v774 = vld [vmem:[#allocation10 + $0x10] sm:$0xff]
    %v775 = vld [vmem:[#allocation10 + $0x18] sm:$0xff]
    %v776 = vld [vmem:[#allocation10 + $0x20] sm:$0xff]
    %v777 = vld [vmem:[#allocation10 + $0x28] sm:$0xff]
    %v778 = vld [vmem:[#allocation10 + $0x30] sm:$0xff]
    %v779 = vld [vmem:[#allocation10 + $0x38] sm:$0xff]
    %v780 = vld [vmem:[#allocation10 + $0x40] sm:$0xff]
    %v781 = vld [vmem:[#allocation10 + $0x48] sm:$0xff]
    %v782 = vld [vmem:[#allocation10 + $0x50] sm:$0xff]
    %v783 = vld [vmem:[#allocation10 + $0x58] sm:$0xff]
    %v784 = vld [vmem:[#allocation10 + $0x60] sm:$0xff]
    %v785 = vld [vmem:[#allocation10 + $0x68] sm:$0xff]
    %v786 = vld [vmem:[#allocation10 + $0x70] sm:$0xff]
    %v787 = vld [vmem:[#allocation10 + $0x78] sm:$0xff]
    %v788 = vld [vmem:[#allocation5] sm:$0xff]
    %v789 = vld [vmem:[#allocation5 + $0x8] sm:$0xff]
    %790 = vmatprep.subr.mxu0 0.0
    %791 = vmatpush1.msra.mxu0 %v772
    %792 = vmatprep.subr.mxu0 0.0
    %793 = vmatpush1.msra.mxu0 %v773
    %794 = vmatprep.subr.mxu0 0.0
    %795 = vmatpush1.msra.mxu0 %v774
    %796 = vmatprep.subr.mxu0 0.0
    %797 = vmatpush1.msra.mxu0 %v775
    %798 = vmatprep.subr.mxu0 0.0
    %799 = vmatpush1.msra.mxu0 %v776
    %800 = vmatprep.subr.mxu0 0.0
    %801 = vmatpush1.msra.mxu0 %v777
    %802 = vmatprep.subr.mxu0 0.0
    %803 = vmatpush1.msra.mxu0 %v778
    %804 = vmatprep.subr.mxu0 0.0
    %805 = vmatpush1.msra.mxu0 %v779
    %806 = vmatprep.subr.mxu0 0.0
    %807 = vmatpush1.msra.mxu0 %v780
    %808 = vmatprep.subr.mxu0 0.0
    %809 = vmatpush1.msra.mxu0 %v781
    %810 = vmatprep.subr.mxu0 0.0
    %811 = vmatpush1.msra.mxu0 %v782
    %812 = vmatprep.subr.mxu0 0.0
    %813 = vmatpush1.msra.mxu0 %v783
    %814 = vmatprep.subr.mxu0 0.0
    %815 = vmatpush1.msra.mxu0 %v784
    %816 = vmatprep.subr.mxu0 0.0
    %817 = vmatpush1.msra.mxu0 %v785
    %818 = vmatprep.subr.mxu0 0.0
    %819 = vmatpush1.msra.mxu0 %v786
    %820 = vmatprep.subr.mxu0 0.0
    %821 = vmatpush1.msra.mxu0 %v787
    %822 = vmatprep.subr.mxu0 0.0
    %823 = vmatpush1.msra.mxu0 0.0
    %824 = vmatprep.subr.mxu0 0.0
    %825 = vmatpush1.msra.mxu0 0.0
    %826 = vmatprep.subr.mxu0 0.0
    %827 = vmatpush1.msra.mxu0 0.0
    %828 = vmatprep.subr.mxu0 0.0
    %829 = vmatpush1.msra.mxu0 0.0
    %830 = vmatprep.subr.mxu0 0.0
    %831 = vmatpush1.msra.mxu0 0.0
    %832 = vmatprep.subr.mxu0 0.0
    %833 = vmatpush1.msra.mxu0 0.0
    %834 = vmatprep.subr.mxu0 0.0
    %835 = vmatpush1.msra.mxu0 0.0
    %836 = vmatprep.subr.mxu0 0.0
    %837 = vmatpush1.msra.mxu0 0.0
    %838 = vmatprep.subr.mxu0 0.0
    %839 = vmatpush1.msra.mxu0 0.0
    %840 = vmatprep.subr.mxu0 0.0
    %841 = vmatpush1.msra.mxu0 0.0
    %842 = vmatprep.subr.mxu0 0.0
    %843 = vmatpush1.msra.mxu0 0.0
    %844 = vmatprep.subr.mxu0 0.0
    %845 = vmatpush1.msra.mxu0 0.0
    %846 = vmatprep.subr.mxu0 0.0
    %847 = vmatpush1.msra.mxu0 0.0
    %848 = vmatprep.subr.mxu0 0.0
    %849 = vmatpush1.msra.mxu0 0.0
    %850 = vmatprep.subr.mxu0 0.0
    %851 = vmatpush1.msra.mxu0 0.0
    %852 = vmatprep.subr.mxu0 0.0
    %853 = vmatpush1.msra.mxu0 0.0
    %854 = vmatprep.mubr.f32.mxu0 0.0
    %855 = vmatmul.mubr.f32.gmra.mrb[0].mxu0 %v768
    %v856 = vpop.f32.mrb[0].mxu0
    %v857 = vadd.f32 %v788, %v856
    %v858 = vpop.f32.mrb[0].mxu0
    %859 = vmatprep.mubr.f32.mxu0 0.0
    %860 = vmatmul.mubr.f32.gmra.mrb[0].mxu0 %v771
    %v861 = vpop.f32.mrb[0].mxu0
    %v862 = vadd.f32 %v789, %v861
    %v863 = vpop.f32.mrb[0].mxu0
    %864 = vdwg.mxu0
    %v865 = vmul.f32 %v857, 0.5
    %v866 = vmul.f32 %v862, 0.5
    %v867 = vadd.f32 %v865, 0.0
    %vm868 = vcmp.ge.f32.partialorder %v867, 1.0
    %v869 = vsel %vm868, 1, 0
    %v870 = vcvt.s32.f32 %v869
    %v871 = vadd.f32 %v870, 0.0
    %v872 = vsel %vm868, 0.0, %v867
    %v873 = vmul.f32 %v872, 0.5
    %v875 = vrot.slane %v865, 2
    %v877 = vadd.f32 %v873, %v875
    %vm878 = vcmp.ge.f32.partialorder %v877, 1.0
    %v879 = vsel %vm878, 1, 0
    %v880 = vcvt.s32.f32 %v879
    %v881 = vadd.f32 %v871, %v880
    %v882 = vsel %vm878, 0.0, %v877
    %v883 = vmul.f32 %v882, 0.5
    %v884 = vrot.slane %v865, 4
    %v886 = vadd.f32 %v883, %v884
    %vm887 = vcmp.ge.f32.partialorder %v886, 1.0
    %v888 = vsel %vm887, 1, 0
    %v889 = vcvt.s32.f32 %v888
    %v890 = vadd.f32 %v881, %v889
    %v891 = vsel %vm887, 0.0, %v886
    %v892 = vmul.f32 %v891, 0.5
    %v893 = vrot.slane %v865, 6
    %v895 = vadd.f32 %v892, %v893
    %vm896 = vcmp.ge.f32.partialorder %v895, 1.0
    %v897 = vsel %vm896, 1, 0
    %v898 = vcvt.s32.f32 %v897
    %v899 = vadd.f32 %v890, %v898
    %v900 = vsel %vm896, 0.0, %v895
    %v901 = vmul.f32 %v900, 0.5
    %v902 = vadd.f32 %v901, %v866
    %vm903 = vcmp.ge.f32.partialorder %v902, 1.0
    %v904 = vsel %vm903, 1, 0
    %v905 = vcvt.s32.f32 %v904
    %v906 = vadd.f32 %v899, %v905
    %v907 = vsel %vm903, 0.0, %v902
    %v908 = vmul.f32 %v907, 0.5
    %v910 = vrot.slane %v866, 2
    %v912 = vadd.f32 %v908, %v910
    %vm913 = vcmp.ge.f32.partialorder %v912, 1.0
    %v914 = vsel %vm913, 1, 0
    %v915 = vcvt.s32.f32 %v914
    %v916 = vadd.f32 %v906, %v915
    %v917 = vsel %vm913, 0.0, %v912
    %v918 = vmul.f32 %v917, 0.5
    %v919 = vrot.slane %v866, 4
    %v921 = vadd.f32 %v918, %v919
    %vm922 = vcmp.ge.f32.partialorder %v921, 1.0
    %v923 = vsel %vm922, 1, 0
    %v924 = vcvt.s32.f32 %v923
    %v925 = vadd.f32 %v916, %v924
    %v926 = vsel %vm922, 0.0, %v921
    %v927 = vmul.f32 %v926, 0.5
    %v928 = vrot.slane %v866, 6
    %v930 = vadd.f32 %v927, %v928
    %vm931 = vcmp.ge.f32.partialorder %v930, 1.0
    %v932 = vsel %vm931, 1, 0
    %v933 = vcvt.s32.f32 %v932
    %v934 = vadd.f32 %v925, %v933
    %v935 = vmul.f32 %v934, 0.125
    %936 = vst [vmem:[#allocation11] sm:$0x3] %v935
    // Predicated region
    $region50: #{tpu_custom_call.1} parent=1 // pred_check
      _
    $region51: #{tpu_custom_call.1} parent=1 // pred_check_branch
      %938 = sbr.rel (0) target = $region53
    $region52: #{tpu_custom_call.1} parent=1 // pred_region
      %s940 = ssub.s32 32, 32
      %941 = vsyncadd [#allocation4], %s940
      %s943 = sshll.u32 [#allocation11], 4
      %s944 = int_to_ptr.vmem [resolvable:$true] %s943
      %946 = dma.vmem_to_hbm [thread:$0]  %s944, 32, %s7, [#allocation4]
    $region53: #{tpu_custom_call.1} parent=1 // pred_fallthru
      _
    // Predicated region
    $region54: #{tpu_custom_call.1} parent=1 // pred_check
      _
    $region55: #{tpu_custom_call.1} parent=1 // pred_check_branch
      %948 = sbr.rel (0) target = $region57
    $region56: #{tpu_custom_call.1} parent=1 // pred_region
      %949 = dma.done [#allocation4], 32
    $region57: #{tpu_custom_call.1} parent=1 // pred_fallthru
      _
    %950 = vsyncpa [#allocation3], 1
    %951 = vsyncpa [#allocation6], 1
    %952 = vsyncpa [#allocation9], 1
    %953 = vsyncpa [#allocation4], 1

</llo_original>
